<compile_context>
chip_gen: v6e
topology: v6e:2x2x1
jax: 0.10.0
libtpu: 0.0.40
codegen_flags: <defaults>
</compile_context>

<pallas_src>
import functools

import numpy as np
import jax
import jax.numpy as jnp
from jax.experimental import pallas as pl
from jax.experimental.pallas import tpu as pltpu


# -----------------------------------------------------------------------------
# Kernels
# -----------------------------------------------------------------------------
def _ln_plain_kernel(alpha_ref, bias_ref, x_ref, o_ref, *, eps, hidden):
    """Plain layout: one logical row per physical row (hidden is lane-dense)."""
    xf = x_ref[...].astype(jnp.float32)
    alpha = alpha_ref[0].astype(jnp.float32)
    bias = bias_ref[0].astype(jnp.float32)
    inv_n = jnp.float32(1.0 / hidden)
    # torch.std is unbiased (ddof=1); hidden == 1 -> 1/0 -> NaN, like torch.
    inv_nm1 = (jnp.float32(float("inf")) if hidden == 1
               else jnp.float32(1.0 / (hidden - 1)))

    mean = jnp.sum(xf, axis=-1, keepdims=True) * inv_n            # (tile, 1)
    d = xf - mean
    var = jnp.sum(d * d, axis=-1, keepdims=True) * inv_nm1        # (tile, 1)
    scale = alpha * pl.reciprocal(jnp.sqrt(var) + jnp.float32(eps), approx=False)
    offset = bias - mean * scale                                  # (tile, 1)
    # Single-FMA epilogue; x_ref is re-read so neither `d` nor the f32 copy of
    # x stays live across the store (trims full-tile f32 live ranges).
    o_ref[...] = (x_ref[...].astype(jnp.float32) * scale + offset).astype(o_ref.dtype)


def _ln_packed_kernel(alpha_ref, bias_ref, bmean_ref, seg_ref, segt_ref,
                      x_ref, o_ref, *, eps, hidden):
    """Packed layout: `groups` logical rows of length `hidden` per 128-lane row.

    bmean_ref: (width, width) block-diag kron(I_g, ones(h,h))/h  -> fused
               per-logical-row mean *and* broadcast in one matmul.
    seg_ref:   (width, groups) 0/1 segment matrix  -> narrow sum(diff^2).
    segt_ref:  (groups, width) 0/1 segment matrix  -> broadcast per-row scale.
    """
    xf = x_ref[...].astype(jnp.float32)
    alpha = alpha_ref[0].astype(jnp.float32)
    bias = bias_ref[0].astype(jnp.float32)
    inv_nm1 = (jnp.float32(float("inf")) if hidden == 1
               else jnp.float32(1.0 / (hidden - 1)))

    # Matmul #1: per-logical-row mean already broadcast to all `width` lanes.
    mean_b = jnp.dot(xf, bmean_ref[...], preferred_element_type=jnp.float32)
    d = xf - mean_b
    # Matmul #2: narrow (tile, groups) sum of squares; sqrt/reciprocal stay
    # narrow so the EUP never runs over full tiles.
    ssq = jnp.dot(d * d, seg_ref[...], preferred_element_type=jnp.float32)
    std = jnp.sqrt(ssq * inv_nm1)
    scale = alpha * pl.reciprocal(std + jnp.float32(eps), approx=False)
    # Matmul #3: broadcast the per-row scale back to lanes; epilogue is one FMA.
    scale_b = jnp.dot(scale, segt_ref[...], preferred_element_type=jnp.float32)
    o_ref[...] = (d * scale_b + bias).astype(o_ref.dtype)


# -----------------------------------------------------------------------------
# Wrapper
# -----------------------------------------------------------------------------
def _vmem_limit_bytes() -> int:
    """Scoped-VMEM limit per generation: 64 MiB on 128 MiB parts, 48 MiB on v7x."""
    try:
        cap = int(pltpu.get_tpu_info().vmem_capacity_bytes)
    except Exception:
        cap = 64 * 1024 * 1024          # conservative fallback (v7x-sized VMEM)
    return 64 * 1024 * 1024 if cap >= 128 * 1024 * 1024 else 48 * 1024 * 1024


def layer_normalization(x: jax.Array,
                        alpha: jax.Array,
                        bias: jax.Array,
                        eps: float = 1e-6) -> jax.Array:
    """alpha * (x - mean) / (std + eps) + bias over the last axis (Pallas TPU)."""
    orig_shape = x.shape
    hidden = int(orig_shape[-1])
    rows = 1
    for d in orig_shape[:-1]:
        rows *= int(d)

    alpha = jnp.asarray(alpha).reshape((1,))
    bias = jnp.asarray(bias).reshape((1,))

    # Lane-dense packing: if 1 < hidden < 128 divides 128, pack 128//hidden
    # logical rows per 128-lane physical row.  Rows that don't divide evenly
    # are zero-padded (and sliced off) instead of falling back to a lane-sparse
    # masked-vst layout.
    groups = 1
    if 1 < hidden < 128 and 128 % hidden == 0:
        groups = 128 // hidden
    # TODO(synk): hidden < 128 that does not divide 128 (e.g. 96) keeps the
    # lane-sparse layout; a masked-lane variant could recover full vst width.
    width = groups * hidden

    x2 = x.reshape(rows, hidden)
    pad = (-rows) % groups
    if pad:
        x2 = jnp.concatenate([x2, jnp.zeros((pad, hidden), x2.dtype)], axis=0)
    packed_rows = (rows + pad) // groups
    x2d = x2.reshape(packed_rows, width)

    # ---- Row-tile sizing ----------------------------------------------------
    itemsize = jnp.dtype(x.dtype).itemsize
    sub = {1: 32, 2: 16}.get(itemsize, 8)        # dtype-aware sublane multiple
    vmem_limit = _vmem_limit_bytes()
    # Budget the block by its f32 working set: double-buffered in + out blocks
    # plus the full-tile f32 temporaries the kernel body creates.
    n_f32_temps = 6 if groups > 1 else 4
    per_row_bytes = width * (4 * itemsize + n_f32_temps * 4)
    budget = vmem_limit - 2 * 1024 * 1024        # headroom: seg inputs, misc
    row_tile = max(sub, (budget // per_row_bytes) // sub * sub)
    # Keep >= ~4 grid steps so both v7x TensorCores get work and the DMA
    # pipeline overlaps compute (single-block grids leave one core idle).
    cap_tile = -(-packed_rows // 4)
    cap_tile = max(sub, -(-cap_tile // sub) * sub)
    row_tile = min(row_tile, cap_tile)
    if row_tile >= packed_rows:
        row_tile = packed_rows                   # single full-extent block
    grid = (pl.cdiv(packed_rows, row_tile),)

    cost = pl.CostEstimate(
        flops=8 * rows * hidden,
        transcendentals=2 * rows,                       # sqrt + reciprocal / row
        bytes_accessed=2 * rows * hidden * itemsize,    # read x + write out
    )
    compiler_params = pltpu.CompilerParams(
        dimension_semantics=("parallel",),      # shard row loop across v7x cores
        vmem_limit_bytes=vmem_limit,
    )
    out_shape = jax.ShapeDtypeStruct((packed_rows, width), x.dtype)
    x_spec = pl.BlockSpec((row_tile, width), lambda i: (i, 0))
    o_spec = pl.BlockSpec((row_tile, width), lambda i: (i, 0))
    smem = pl.BlockSpec(memory_space=pltpu.SMEM)

    if groups == 1:
        out2d = pl.pallas_call(
            functools.partial(_ln_plain_kernel, eps=float(eps), hidden=hidden),
            out_shape=out_shape,
            grid=grid,
            in_specs=[smem, smem, x_spec],
            out_specs=o_spec,
            compiler_params=compiler_params,
            cost_estimate=cost,
        )(alpha, bias, x2d)
    else:
        # Segment matrices: built once on the host (hoisted out of the grid
        # loop) and streamed as small constant-index VMEM blocks.
        eye = np.eye(groups, dtype=np.float32)
        bmean = jnp.asarray(np.kron(eye, np.full((hidden, hidden),
                                                 1.0 / hidden, np.float32)))
        seg = jnp.asarray(np.kron(eye, np.ones((hidden, 1), np.float32)))
        segt = jnp.asarray(np.kron(eye, np.ones((1, hidden), np.float32)))
        out2d = pl.pallas_call(
            functools.partial(_ln_packed_kernel, eps=float(eps), hidden=hidden),
            out_shape=out_shape,
            grid=grid,
            in_specs=[
                smem, smem,
                pl.BlockSpec((width, width), lambda i: (0, 0)),    # bmean
                pl.BlockSpec((width, groups), lambda i: (0, 0)),   # seg
                pl.BlockSpec((groups, width), lambda i: (0, 0)),   # segt
                x_spec,
            ],
            out_specs=o_spec,
            compiler_params=compiler_params,
            cost_estimate=cost,
        )(alpha, bias, bmean, seg, segt, x2d)

    out = out2d.reshape(packed_rows * groups, hidden)
    if pad:
        out = out[:rows]
    return out.reshape(orig_shape)


if __name__ == "__main__":
    key = jax.random.PRNGKey(0)
    alpha = jnp.ones((1,), dtype=jnp.float32)    # nn.Parameter(torch.ones(1))
    bias = jnp.zeros((1,), dtype=jnp.float32)    # nn.Parameter(torch.zeros(1))
    eps = 1e-6

    def ref_fn(xx):
        mean = jnp.mean(xx, axis=-1, keepdims=True)
        std = jnp.std(xx, axis=-1, keepdims=True, ddof=1)   # unbiased, like torch.std
        return alpha * (xx - mean) / (std + eps) + bias

    # 1) Packed path (hidden < 128 -> 4 logical rows per 128-lane physical row).
    x1 = jax.random.normal(key, (2, 8, 32), dtype=jnp.float32)
    o1 = jax.block_until_ready(layer_normalization(x1, alpha, bias, eps))
    assert o1.shape == x1.shape
    assert jnp.allclose(o1, ref_fn(x1), atol=1e-5, rtol=1e-5), "mismatch (packed path)"

    # 2) Plain lane-dense path (hidden >= 128), multi-step grid.
    x2 = jax.random.normal(jax.random.PRNGKey(1), (2, 8, 256), dtype=jnp.float32)
    o2 = jax.block_until_ready(layer_normalization(x2, alpha, bias, eps))
    assert jnp.allclose(o2, ref_fn(x2), atol=1e-5, rtol=1e-5), "mismatch (wide path)"

    # 3) Packed path with rows % groups != 0 (exercises the zero-row padding).
    x3 = jax.random.normal(jax.random.PRNGKey(2), (3, 5, 32), dtype=jnp.float32)
    o3 = jax.block_until_ready(layer_normalization(x3, alpha, bias, eps))
    assert jnp.allclose(o3, ref_fn(x3), atol=1e-5, rtol=1e-5), "mismatch (padded path)"

    print("KERNEL_OK")
</pallas_src>

<mosaic_0001>
module attributes {stable_mosaic.version = 11 : i64} {
  func.func @_ln_packed_kernel(%arg0: i32, %arg1: memref<1xf32, #tpu.memory_space<smem>>, %arg2: memref<1xf32, #tpu.memory_space<smem>>, %arg3: memref<128x128xf32, #tpu.memory_space<vmem>>, %arg4: memref<128x4xf32, #tpu.memory_space<vmem>>, %arg5: memref<4x128xf32, #tpu.memory_space<vmem>>, %arg6: memref<4x128xf32, #tpu.memory_space<vmem>>, %arg7: memref<4x128xf32, #tpu.memory_space<vmem>>) attributes {dimension_semantics = [#tpu.dimension_semantics<parallel>], iteration_bounds = array<i64: 1>, scalar_prefetch = 0 : i64, scratch_operands = 0 : i64, tpu.core_type = #tpu.core_type<tc>, window_params = [{transform_indices = @transform_0, window_bounds = array<i64: 1>}, {transform_indices = @transform_1, window_bounds = array<i64: 1>}, {pipeline_mode = #tpu.pipeline_mode<synchronous>, transform_indices = @transform_2, window_bounds = array<i64: 128, 128>}, {pipeline_mode = #tpu.pipeline_mode<synchronous>, transform_indices = @transform_3, window_bounds = array<i64: 128, 4>}, {pipeline_mode = #tpu.pipeline_mode<synchronous>, transform_indices = @transform_4, window_bounds = array<i64: 4, 128>}, {transform_indices = @transform_5, window_bounds = array<i64: 4, 128>}, {transform_indices = @transform_6, window_bounds = array<i64: 4, 128>}]} {
    %c0 = arith.constant 0 : index
    %c0_0 = arith.constant 0 : index
    %0 = vector.load %arg6[%c0, %c0_0] : memref<4x128xf32, #tpu.memory_space<vmem>>, vector<4x128xf32>
    %c0_1 = arith.constant 0 : index
    %1 = memref.load %arg1[%c0_1] : memref<1xf32, #tpu.memory_space<smem>>
    %c0_2 = arith.constant 0 : index
    %2 = memref.load %arg2[%c0_2] : memref<1xf32, #tpu.memory_space<smem>>
    %c0_3 = arith.constant 0 : index
    %c0_4 = arith.constant 0 : index
    %3 = vector.load %arg3[%c0_3, %c0_4] : memref<128x128xf32, #tpu.memory_space<vmem>>, vector<128x128xf32>
    %cst = arith.constant dense<0.000000e+00> : vector<4x128xf32>
    %4 = tpu.matmul %0, %3, %cst {dimension_numbers = #tpu.dot_dimension_numbers<[1], [0], [0], [1], [0, 0, 1, 1], [], []>} : vector<4x128xf32>, vector<128x128xf32>, vector<4x128xf32> -> vector<4x128xf32>
    %5 = arith.subf %0, %4 : vector<4x128xf32>
    %6 = arith.mulf %5, %5 : vector<4x128xf32>
    %c0_5 = arith.constant 0 : index
    %c0_6 = arith.constant 0 : index
    %7 = vector.load %arg4[%c0_5, %c0_6] : memref<128x4xf32, #tpu.memory_space<vmem>>, vector<128x4xf32>
    %cst_7 = arith.constant dense<0.000000e+00> : vector<4x4xf32>
    %8 = tpu.matmul %6, %7, %cst_7 {dimension_numbers = #tpu.dot_dimension_numbers<[1], [0], [0], [1], [0, 0, 1, 1], [], []>} : vector<4x128xf32>, vector<128x4xf32>, vector<4x4xf32> -> vector<4x4xf32>
    %cst_8 = arith.constant 0.0322580636 : f32
    %9 = vector.broadcast %cst_8 : f32 to vector<4x4xf32>
    %10 = arith.mulf %8, %9 : vector<4x4xf32>
    %11 = math.sqrt %10 : vector<4x4xf32>
    %cst_9 = arith.constant 9.99999997E-7 : f32
    %12 = vector.broadcast %cst_9 : f32 to vector<4x4xf32>
    %13 = arith.addf %11, %12 : vector<4x4xf32>
    %14 = tpu.reciprocal %13 : vector<4x4xf32> -> vector<4x4xf32>
    %15 = vector.broadcast %1 : f32 to vector<4x4xf32>
    %16 = arith.mulf %15, %14 : vector<4x4xf32>
    %c0_10 = arith.constant 0 : index
    %c0_11 = arith.constant 0 : index
    %17 = vector.load %arg5[%c0_10, %c0_11] : memref<4x128xf32, #tpu.memory_space<vmem>>, vector<4x128xf32>
    %cst_12 = arith.constant dense<0.000000e+00> : vector<4x128xf32>
    %18 = tpu.matmul %16, %17, %cst_12 {dimension_numbers = #tpu.dot_dimension_numbers<[1], [0], [0], [1], [0, 0, 1, 1], [], []>} : vector<4x4xf32>, vector<4x128xf32>, vector<4x128xf32> -> vector<4x128xf32>
    %19 = arith.mulf %5, %18 : vector<4x128xf32>
    %20 = vector.broadcast %2 : f32 to vector<4x128xf32>
    %21 = arith.addf %19, %20 : vector<4x128xf32>
    %c0_13 = arith.constant 0 : index
    %c0_14 = arith.constant 0 : index
    %22 = vector.load %arg7[%c0_13, %c0_14] : memref<4x128xf32, #tpu.memory_space<vmem>>, vector<4x128xf32>
    tpu.vector_store %arg7[%c0_13, %c0_14], %21 {strides = array<i32>} : memref<4x128xf32, #tpu.memory_space<vmem>>, vector<4x128xf32>,
    return
  }
  func.func @transform_0(%arg0: i32) -> i32 {
    %c0_i32 = arith.constant 0 : i32
    %c0_i32_0 = arith.constant 0 : i32
    return %c0_i32 : i32
  }
  func.func @transform_1(%arg0: i32) -> i32 {
    %c0_i32 = arith.constant 0 : i32
    %c0_i32_0 = arith.constant 0 : i32
    return %c0_i32 : i32
  }
  func.func @transform_2(%arg0: i32) -> (i32, i32) {
    %c0_i32 = arith.constant 0 : i32
    %c0_i32_0 = arith.constant 0 : i32
    %c0_i32_1 = arith.constant 0 : i32
    return %c0_i32, %c0_i32_0 : i32, i32
  }
  func.func @transform_3(%arg0: i32) -> (i32, i32) {
    %c0_i32 = arith.constant 0 : i32
    %c0_i32_0 = arith.constant 0 : i32
    %c0_i32_1 = arith.constant 0 : i32
    return %c0_i32, %c0_i32_0 : i32, i32
  }
  func.func @transform_4(%arg0: i32) -> (i32, i32) {
    %c0_i32 = arith.constant 0 : i32
    %c0_i32_0 = arith.constant 0 : i32
    %c0_i32_1 = arith.constant 0 : i32
    return %c0_i32, %c0_i32_0 : i32, i32
  }
  func.func @transform_5(%arg0: i32) -> (i32, i32) {
    %c0_i32 = arith.constant 0 : i32
    %c0_i32_0 = arith.constant 0 : i32
    return %arg0, %c0_i32 : i32, i32
  }
  func.func @transform_6(%arg0: i32) -> (i32, i32) {
    %c0_i32 = arith.constant 0 : i32
    %c0_i32_0 = arith.constant 0 : i32
    return %arg0, %c0_i32 : i32, i32
  }
}

</mosaic_0001>

<llo_original>
// kernel: tpu_custom_call.1
$region0: #{tpu_custom_call.1}
  #allocation0 [shape = 'u32[]', space=smem, size = 0x4, offset = 0x4, fixed_abs, tag = 'smem constant byte address 0x4 - core index']
  #allocation1 [shape = 'u32[144,128]{1,0:T(1,128)}', space=vmem, size = 0x12000, scoped, tag = 'internal scratch']
  #allocation2 [shape = 'f32[1]{0:T(128)S(6)}', space=smem, size = 0x200, scoped, tag = 'scoped memory for tpu_custom_call.1']
  #allocation3 [shape = 'f32[1]{0:T(128)S(6)}', space=smem, size = 0x200, scoped, tag = 'scoped memory for tpu_custom_call.1']
  %s0 = inlined_call_operand.<no memory space> [shape: f32[1], index: 0, kind: input, shape index: {}]
  %s1 = inlined_call_operand.<no memory space> [shape: f32[1], index: 1, kind: input, shape index: {}]
  %s2 = inlined_call_operand.vmem [shape: f32[128,128], index: 2, kind: input, shape index: {}]
  %s3 = inlined_call_operand.vmem [shape: f32[128,4], index: 3, kind: input, shape index: {}]
  %s4 = inlined_call_operand.vmem [shape: f32[4,128], index: 4, kind: input, shape index: {}]
  %s5 = inlined_call_operand.vmem [shape: f32[4,128], index: 5, kind: input, shape index: {}]
  %s6 = inlined_call_operand.hbm [shape: f32[4,128], index: 6, kind: output, shape index: {}]
  %s7 = sld [smem:[#allocation0]]
  $region34: #{tpu_custom_call.1} parent=0
    _
  %s9 = ssub.s32 1, %s7
  %s10 = scalar_select 0, %s9, %s7
  %11 = sst [smem:[#allocation2]] %s0
  %12 = sst [smem:[#allocation3]] %s1
  $region1: #{tpu_custom_call.1} parent=0
    #allocation4 [shape = 'u8[2048]{0}', space=vmem, size = 0x800, scoped, tag = 'output window, operand 0, single buffered']
    #allocation5 [shape = 's32[1]{0}', space=sflag, size = 0x4, scoped, tag = 'scoped memory for tpu_custom_call.1']
    %13 = vsyncpa [#allocation5], 0
    // Predicated region
    $region2: #{tpu_custom_call.1} parent=1 // pred_check
      _
    $region3: #{tpu_custom_call.1} parent=1 // pred_check_branch
      %15 = sbr.rel (0) target = $region5
    $region4: #{tpu_custom_call.1} parent=1 // pred_region
      _
    $region5: #{tpu_custom_call.1} parent=1 // pred_fallthru
      _
    // Predicated region
    $region6: #{tpu_custom_call.1} parent=1 // pred_check
      _
    $region7: #{tpu_custom_call.1} parent=1 // pred_check_branch
      %17 = sbr.rel (0) target = $region9
    $region8: #{tpu_custom_call.1} parent=1 // pred_region
      _
    $region9: #{tpu_custom_call.1} parent=1 // pred_fallthru
      _
    // Predicated region
    $region10: #{tpu_custom_call.1} parent=1 // pred_check
      _
    $region11: #{tpu_custom_call.1} parent=1 // pred_check_branch
      %19 = sbr.rel (0) target = $region13
    $region12: #{tpu_custom_call.1} parent=1 // pred_region
      _
    $region13: #{tpu_custom_call.1} parent=1 // pred_fallthru
      _
    // Predicated region
    $region14: #{tpu_custom_call.1} parent=1 // pred_check
      _
    $region15: #{tpu_custom_call.1} parent=1 // pred_check_branch
      %21 = sbr.rel (0) target = $region17
    $region16: #{tpu_custom_call.1} parent=1 // pred_region
      _
    $region17: #{tpu_custom_call.1} parent=1 // pred_fallthru
      _
    // Predicated region
    $region18: #{tpu_custom_call.1} parent=1 // pred_check
      _
    $region19: #{tpu_custom_call.1} parent=1 // pred_check_branch
      %23 = sbr.rel (0) target = $region21
    $region20: #{tpu_custom_call.1} parent=1 // pred_region
      _
    $region21: #{tpu_custom_call.1} parent=1 // pred_fallthru
      _
    // Predicated region
    $region22: #{tpu_custom_call.1} parent=1 // pred_check
      _
    $region23: #{tpu_custom_call.1} parent=1 // pred_check_branch
      %25 = sbr.rel (0) target = $region25
    $region24: #{tpu_custom_call.1} parent=1 // pred_region
      _
    $region25: #{tpu_custom_call.1} parent=1 // pred_fallthru
      _
    %v26 = vld [vmem:[%s5] sm:$0xf]
    %s27 = sld [smem:[#allocation2]]
    %s28 = sld [smem:[#allocation3]]
    %v29 = vld [vmem:[%s2] sm:$0xff]
    %v30 = vld [vmem:[%s2 + $0x8] sm:$0xff]
    %v31 = vld [vmem:[%s2 + $0x10] sm:$0xff]
    %v32 = vld [vmem:[%s2 + $0x18] sm:$0xff]
    %v33 = vld [vmem:[%s2 + $0x20] sm:$0xff]
    %v34 = vld [vmem:[%s2 + $0x28] sm:$0xff]
    %v35 = vld [vmem:[%s2 + $0x30] sm:$0xff]
    %v36 = vld [vmem:[%s2 + $0x38] sm:$0xff]
    %v37 = vld [vmem:[%s2 + $0x40] sm:$0xff]
    %v38 = vld [vmem:[%s2 + $0x48] sm:$0xff]
    %v39 = vld [vmem:[%s2 + $0x50] sm:$0xff]
    %v40 = vld [vmem:[%s2 + $0x58] sm:$0xff]
    %v41 = vld [vmem:[%s2 + $0x60] sm:$0xff]
    %v42 = vld [vmem:[%s2 + $0x68] sm:$0xff]
    %v43 = vld [vmem:[%s2 + $0x70] sm:$0xff]
    %v44 = vld [vmem:[%s2 + $0x78] sm:$0xff]
    %45 = vmatprep.subr.mxu0 0.0
    %46 = vmatpush1.msra.mxu0 %v44
    %47 = vmatprep.subr.mxu0 0.0
    %48 = vmatpush1.msra.mxu0 %v43
    %49 = vmatprep.subr.mxu0 0.0
    %50 = vmatpush1.msra.mxu0 %v42
    %51 = vmatprep.subr.mxu0 0.0
    %52 = vmatpush1.msra.mxu0 %v41
    %53 = vmatprep.subr.mxu0 0.0
    %54 = vmatpush1.msra.mxu0 %v40
    %55 = vmatprep.subr.mxu0 0.0
    %56 = vmatpush1.msra.mxu0 %v39
    %57 = vmatprep.subr.mxu0 0.0
    %58 = vmatpush1.msra.mxu0 %v38
    %59 = vmatprep.subr.mxu0 0.0
    %60 = vmatpush1.msra.mxu0 %v37
    %61 = vmatprep.subr.mxu0 0.0
    %62 = vmatpush1.msra.mxu0 %v36
    %63 = vmatprep.subr.mxu0 0.0
    %64 = vmatpush1.msra.mxu0 %v35
    %65 = vmatprep.subr.mxu0 0.0
    %66 = vmatpush1.msra.mxu0 %v34
    %67 = vmatprep.subr.mxu0 0.0
    %68 = vmatpush1.msra.mxu0 %v33
    %69 = vmatprep.subr.mxu0 0.0
    %70 = vmatpush1.msra.mxu0 %v32
    %71 = vmatprep.subr.mxu0 0.0
    %72 = vmatpush1.msra.mxu0 %v31
    %73 = vmatprep.subr.mxu0 0.0
    %74 = vmatpush1.msra.mxu0 %v30
    %75 = vmatprep.subr.mxu0 0.0
    %76 = vmatpush1.msra.mxu0 %v29
    %77 = vmatprep.subr.mxu0 0.0
    %78 = vmatpush2.msra.mxu0 0.0
    %79 = vmatprep.subr.mxu0 0.0
    %80 = vmatpush2.msra.mxu0 0.0
    %81 = vmatprep.subr.mxu0 0.0
    %82 = vmatpush2.msra.mxu0 0.0
    %83 = vmatprep.subr.mxu0 0.0
    %84 = vmatpush2.msra.mxu0 0.0
    %85 = vmatprep.subr.mxu0 0.0
    %86 = vmatpush2.msra.mxu0 0.0
    %87 = vmatprep.subr.mxu0 0.0
    %88 = vmatpush2.msra.mxu0 0.0
    %89 = vmatprep.subr.mxu0 0.0
    %90 = vmatpush2.msra.mxu0 0.0
    %91 = vmatprep.subr.mxu0 0.0
    %92 = vmatpush2.msra.mxu0 0.0
    %93 = vmatprep.subr.mxu0 0.0
    %94 = vmatpush2.msra.mxu0 0.0
    %95 = vmatprep.subr.mxu0 0.0
    %96 = vmatpush2.msra.mxu0 0.0
    %97 = vmatprep.subr.mxu0 0.0
    %98 = vmatpush2.msra.mxu0 0.0
    %99 = vmatprep.subr.mxu0 0.0
    %100 = vmatpush2.msra.mxu0 0.0
    %101 = vmatprep.subr.mxu0 0.0
    %102 = vmatpush2.msra.mxu0 0.0
    %103 = vmatprep.subr.mxu0 0.0
    %104 = vmatpush2.msra.mxu0 0.0
    %105 = vmatprep.subr.mxu0 0.0
    %106 = vmatpush2.msra.mxu0 0.0
    %107 = vmatprep.subr.mxu0 0.0
    %108 = vmatpush2.msra.mxu0 0.0
    %109 = vmatprep.mubr.f32.mxu0 0.0
    %110 = vmatmul.mubr.f32.gmra.mxu0 %v26
    %v111 = vpop.f32.mrf.mxu0
    %v112 = vadd.f32 0.0, %v111
    %v113 = vpop.f32.mrf.mxu0
    %114 = vdwg.mxu0
    %v115 = vsub.f32 %v26, %v112
    %v116 = vmul.f32 %v115, %v115
    %v117 = vld [vmem:[%s3] sm:$0xff]
    %v118 = vld [vmem:[%s3 + $0x8] sm:$0xff]
    %v119 = vld [vmem:[%s3 + $0x10] sm:$0xff]
    %v120 = vld [vmem:[%s3 + $0x18] sm:$0xff]
    %v121 = vld [vmem:[%s3 + $0x20] sm:$0xff]
    %v122 = vld [vmem:[%s3 + $0x28] sm:$0xff]
    %v123 = vld [vmem:[%s3 + $0x30] sm:$0xff]
    %v124 = vld [vmem:[%s3 + $0x38] sm:$0xff]
    %v125 = vld [vmem:[%s3 + $0x40] sm:$0xff]
    %v126 = vld [vmem:[%s3 + $0x48] sm:$0xff]
    %v127 = vld [vmem:[%s3 + $0x50] sm:$0xff]
    %v128 = vld [vmem:[%s3 + $0x58] sm:$0xff]
    %v129 = vld [vmem:[%s3 + $0x60] sm:$0xff]
    %v130 = vld [vmem:[%s3 + $0x68] sm:$0xff]
    %v131 = vld [vmem:[%s3 + $0x70] sm:$0xff]
    %v132 = vld [vmem:[%s3 + $0x78] sm:$0xff]
    %133 = vmatprep.subr.mxu0 0.0
    %134 = vmatpush1.msra.mxu0 %v132
    %135 = vmatprep.subr.mxu0 0.0
    %136 = vmatpush1.msra.mxu0 %v131
    %137 = vmatprep.subr.mxu0 0.0
    %138 = vmatpush1.msra.mxu0 %v130
    %139 = vmatprep.subr.mxu0 0.0
    %140 = vmatpush1.msra.mxu0 %v129
    %141 = vmatprep.subr.mxu0 0.0
    %142 = vmatpush1.msra.mxu0 %v128
    %143 = vmatprep.subr.mxu0 0.0
    %144 = vmatpush1.msra.mxu0 %v127
    %145 = vmatprep.subr.mxu0 0.0
    %146 = vmatpush1.msra.mxu0 %v126
    %147 = vmatprep.subr.mxu0 0.0
    %148 = vmatpush1.msra.mxu0 %v125
    %149 = vmatprep.subr.mxu0 0.0
    %150 = vmatpush1.msra.mxu0 %v124
    %151 = vmatprep.subr.mxu0 0.0
    %152 = vmatpush1.msra.mxu0 %v123
    %153 = vmatprep.subr.mxu0 0.0
    %154 = vmatpush1.msra.mxu0 %v122
    %155 = vmatprep.subr.mxu0 0.0
    %156 = vmatpush1.msra.mxu0 %v121
    %157 = vmatprep.subr.mxu0 0.0
    %158 = vmatpush1.msra.mxu0 %v120
    %159 = vmatprep.subr.mxu0 0.0
    %160 = vmatpush1.msra.mxu0 %v119
    %161 = vmatprep.subr.mxu0 0.0
    %162 = vmatpush1.msra.mxu0 %v118
    %163 = vmatprep.subr.mxu0 0.0
    %164 = vmatpush1.msra.mxu0 %v117
    %165 = vmatprep.subr.mxu0 0.0
    %166 = vmatpush2.msra.mxu0 0.0
    %167 = vmatprep.subr.mxu0 0.0
    %168 = vmatpush2.msra.mxu0 0.0
    %169 = vmatprep.subr.mxu0 0.0
    %170 = vmatpush2.msra.mxu0 0.0
    %171 = vmatprep.subr.mxu0 0.0
    %172 = vmatpush2.msra.mxu0 0.0
    %173 = vmatprep.subr.mxu0 0.0
    %174 = vmatpush2.msra.mxu0 0.0
    %175 = vmatprep.subr.mxu0 0.0
    %176 = vmatpush2.msra.mxu0 0.0
    %177 = vmatprep.subr.mxu0 0.0
    %178 = vmatpush2.msra.mxu0 0.0
    %179 = vmatprep.subr.mxu0 0.0
    %180 = vmatpush2.msra.mxu0 0.0
    %181 = vmatprep.subr.mxu0 0.0
    %182 = vmatpush2.msra.mxu0 0.0
    %183 = vmatprep.subr.mxu0 0.0
    %184 = vmatpush2.msra.mxu0 0.0
    %185 = vmatprep.subr.mxu0 0.0
    %186 = vmatpush2.msra.mxu0 0.0
    %187 = vmatprep.subr.mxu0 0.0
    %188 = vmatpush2.msra.mxu0 0.0
    %189 = vmatprep.subr.mxu0 0.0
    %190 = vmatpush2.msra.mxu0 0.0
    %191 = vmatprep.subr.mxu0 0.0
    %192 = vmatpush2.msra.mxu0 0.0
    %193 = vmatprep.subr.mxu0 0.0
    %194 = vmatpush2.msra.mxu0 0.0
    %195 = vmatprep.subr.mxu0 0.0
    %196 = vmatpush2.msra.mxu0 0.0
    %197 = vmatprep.mubr.f32.mxu0 0.0
    %198 = vmatmul.mubr.f32.gmra.mxu0 %v116
    %v199 = vpop.f32.mrf.mxu0
    %v200 = vadd.f32 0.0, %v199
    %v201 = vpop.f32.mrf.mxu0
    %202 = vdwg.mxu0
    %v203 = vmul.f32 %v200, 0.032258064
    %v204 = vrsqrt.pop %v203
    %v205 = vmul.f32 %v203, %v204
    %vm206 = vcmp.eq.f32.partialorder %v203, inf
    %v207 = vsel %vm206, %v203, %v205
    %vm208 = vcmp.eq.f32.partialorder %v203, 0.0
    %v209 = vand.u32 %v203, 2147483648
    %v210 = vsel %vm208, %v209, %v207
    %v211 = vadd.f32 %v210, 1e-06
    %v212 = vrcp.pop %v211
    %v213 = vstv %s27
    %v214 = vmul.f32 %v213, %v212
    %v215 = vld [vmem:[%s4] sm:$0xf]
    %vm216 = vcmask 31744
    %v218 = vsel %vm216, %v214, 0
    %vm220 = vcmask 1043456
    %v222 = vsel %vm220, %v215, 0
    %224 = vmatprep.subr.mxu0 0.0
    %225 = vmatpush1.msra.mxu0 0.0
    %226 = vmatprep.subr.mxu0 0.0
    %227 = vmatpush1.msra.mxu0 0.0
    %228 = vmatprep.subr.mxu0 0.0
    %229 = vmatpush1.msra.mxu0 0.0
    %230 = vmatprep.subr.mxu0 0.0
    %231 = vmatpush1.msra.mxu0 0.0
    %232 = vmatprep.subr.mxu0 0.0
    %233 = vmatpush1.msra.mxu0 0.0
    %234 = vmatprep.subr.mxu0 0.0
    %235 = vmatpush1.msra.mxu0 0.0
    %236 = vmatprep.subr.mxu0 0.0
    %237 = vmatpush1.msra.mxu0 0.0
    %238 = vmatprep.subr.mxu0 0.0
    %239 = vmatpush1.msra.mxu0 0.0
    %240 = vmatprep.subr.mxu0 0.0
    %241 = vmatpush1.msra.mxu0 0.0
    %242 = vmatprep.subr.mxu0 0.0
    %243 = vmatpush1.msra.mxu0 0.0
    %244 = vmatprep.subr.mxu0 0.0
    %245 = vmatpush1.msra.mxu0 0.0
    %246 = vmatprep.subr.mxu0 0.0
    %247 = vmatpush1.msra.mxu0 0.0
    %248 = vmatprep.subr.mxu0 0.0
    %249 = vmatpush1.msra.mxu0 0.0
    %250 = vmatprep.subr.mxu0 0.0
    %251 = vmatpush1.msra.mxu0 0.0
    %252 = vmatprep.subr.mxu0 0.0
    %253 = vmatpush1.msra.mxu0 0.0
    %254 = vmatprep.subr.mxu0 0.0
    %255 = vmatpush1.msra.mxu0 %v222
    %256 = vmatprep.subr.mxu0 0.0
    %257 = vmatpush2.msra.mxu0 0.0
    %258 = vmatprep.subr.mxu0 0.0
    %259 = vmatpush2.msra.mxu0 0.0
    %260 = vmatprep.subr.mxu0 0.0
    %261 = vmatpush2.msra.mxu0 0.0
    %262 = vmatprep.subr.mxu0 0.0
    %263 = vmatpush2.msra.mxu0 0.0
    %264 = vmatprep.subr.mxu0 0.0
    %265 = vmatpush2.msra.mxu0 0.0
    %266 = vmatprep.subr.mxu0 0.0
    %267 = vmatpush2.msra.mxu0 0.0
    %268 = vmatprep.subr.mxu0 0.0
    %269 = vmatpush2.msra.mxu0 0.0
    %270 = vmatprep.subr.mxu0 0.0
    %271 = vmatpush2.msra.mxu0 0.0
    %272 = vmatprep.subr.mxu0 0.0
    %273 = vmatpush2.msra.mxu0 0.0
    %274 = vmatprep.subr.mxu0 0.0
    %275 = vmatpush2.msra.mxu0 0.0
    %276 = vmatprep.subr.mxu0 0.0
    %277 = vmatpush2.msra.mxu0 0.0
    %278 = vmatprep.subr.mxu0 0.0
    %279 = vmatpush2.msra.mxu0 0.0
    %280 = vmatprep.subr.mxu0 0.0
    %281 = vmatpush2.msra.mxu0 0.0
    %282 = vmatprep.subr.mxu0 0.0
    %283 = vmatpush2.msra.mxu0 0.0
    %284 = vmatprep.subr.mxu0 0.0
    %285 = vmatpush2.msra.mxu0 0.0
    %286 = vmatprep.subr.mxu0 0.0
    %287 = vmatpush2.msra.mxu0 0.0
    %288 = vmatprep.mubr.f32.mxu0 0.0
    %289 = vmatmul.mubr.f32.gmra.mxu0 %v218
    %v290 = vpop.f32.mrf.mxu0
    %v291 = vadd.f32 0.0, %v290
    %v292 = vpop.f32.mrf.mxu0
    %293 = vdwg.mxu0
    %v294 = vmul.f32 %v115, %v291
    %v295 = vstv %s28
    %v296 = vadd.f32 %v294, %v295
    %297 = vst [vmem:[#allocation4] sm:$0xf] %v296
    // Predicated region
    $region26: #{tpu_custom_call.1} parent=1 // pred_check
      _
    $region27: #{tpu_custom_call.1} parent=1 // pred_check_branch
      %299 = sbr.rel (0) target = $region29
    $region28: #{tpu_custom_call.1} parent=1 // pred_region
      %s301 = ssub.s32 64, 64
      %302 = vsyncadd [#allocation5], %s301
      %s304 = sshll.u32 [#allocation4], 4
      %s305 = int_to_ptr.vmem [resolvable:$true] %s304
      %307 = dma.vmem_to_hbm [thread:$0]  %s305, 64, %s6, [#allocation5]
    $region29: #{tpu_custom_call.1} parent=1 // pred_fallthru
      _
    // Predicated region
    $region30: #{tpu_custom_call.1} parent=1 // pred_check
      _
    $region31: #{tpu_custom_call.1} parent=1 // pred_check_branch
      %309 = sbr.rel (0) target = $region33
    $region32: #{tpu_custom_call.1} parent=1 // pred_region
      %310 = dma.done [#allocation5], 64
    $region33: #{tpu_custom_call.1} parent=1 // pred_fallthru
      _
    %311 = vsyncpa [#allocation5], 1

</llo_original>
